<compile_context>
chip_gen: v7x
topology: tpu7x:2x2x1
jax: 0.10.0
libtpu: 0.0.40
codegen_flags: <defaults>
</compile_context>

<pallas_src>
import jax
import jax.numpy as jnp
from jax.experimental import pallas as pl
from jax.experimental.pallas import tpu as pltpu


def _round_up(x, m):
    return ((x + m - 1) // m) * m


def _mtp_head_kernel(x_ref, w_ref, b_ref, o_ref):
    # x_ref: (TM, H)  w_ref: (H, Np)  b_ref: (1, Np)  o_ref: (TM, Np)
    acc = jnp.dot(x_ref[...], w_ref[...], preferred_element_type=jnp.float32)
    o_ref[...] = (acc + b_ref[...]).astype(o_ref.dtype)


def mtp_head(x, weight, bias, *, max_tm=512):
    """x: (..., H); weight: (N, H) (PyTorch Linear layout); bias: (N,)."""
    *lead, H = x.shape
    N = weight.shape[0]
    M = 1
    for d in lead:
        M *= d

    x2d = x.reshape(M, H)
    # Pad output features to a lane-aligned width (multiple of 128).
    N_pad = _round_up(N, 128)
    w = weight.T                                   # (H, N)
    if N_pad != N:
        w = jnp.pad(w, ((0, 0), (0, N_pad - N)))
        b = jnp.pad(bias, (0, N_pad - N))
    else:
        b = bias
    b = b.reshape(1, N_pad)

    # Pick TM so double-buffered x/out tiles + resident weight fit VMEM on
    # all generations (v5e default scoped 16 MiB, v7x physical 64 MiB).
    itemsize = jnp.dtype(x.dtype).itemsize
    per_row_bytes = 2 * (H + N_pad) * itemsize      # x tile + out tile, 2x buffered
    resident_bytes = (H * N_pad + N_pad) * itemsize  # weight + bias stay resident
    budget = 16 * 1024 * 1024
    tm = max_tm
    while tm > 8 and tm * per_row_bytes + resident_bytes > budget:
        tm //= 2
    tm = min(tm, _round_up(M, 8))
    tm = max(8, (tm // 8) * 8)

    # Pad M so the grid tiles evenly (padded rows are sliced off afterwards).
    M_pad = _round_up(M, tm)
    if M_pad != M:
        x2d = jnp.pad(x2d, ((0, M_pad - M), (0, 0)))

    grid = (M_pad // tm,)

    cost = pl.CostEstimate(
        flops=2 * M_pad * H * N_pad,
        transcendentals=0,
        bytes_accessed=itemsize * (M_pad * H + H * N_pad + M_pad * N_pad + N_pad),
    )

    out = pl.pallas_call(
        _mtp_head_kernel,
        out_shape=jax.ShapeDtypeStruct((M_pad, N_pad), x.dtype),
        grid_spec=pltpu.PrefetchScalarGridSpec(
            num_scalar_prefetch=0,
            grid=grid,
            in_specs=[
                pl.BlockSpec((tm, H), lambda i: (i, 0)),       # x tile, pipelined
                pl.BlockSpec((H, N_pad), lambda i: (0, 0)),    # weight, resident
                pl.BlockSpec((1, N_pad), lambda i: (0, 0)),    # bias, resident
            ],
            out_specs=pl.BlockSpec((tm, N_pad), lambda i: (i, 0)),
        ),
        compiler_params=pltpu.CompilerParams(
            dimension_semantics=("parallel",),
            vmem_limit_bytes=32 * 1024 * 1024,
        ),
        cost_estimate=cost,
    )(x2d, w, b)

    out = out[:M, :N]
    return out.reshape(*lead, N)


if __name__ == "__main__":
    B, S, HID = 2, 8, 32
    N_OUT = 1397
    key = jax.random.PRNGKey(0)
    kx, kw, kb = jax.random.split(key, 3)

    x = jax.random.normal(kx, (B, S, HID), dtype=jnp.float32)

    # Mimic PyTorch Linear default init: U(-1/sqrt(H), 1/sqrt(H))
    bound = 1.0 / (HID ** 0.5)
    weight = jax.random.uniform(kw, (N_OUT, HID), dtype=jnp.float32,
                                minval=-bound, maxval=bound)
    bias = jax.random.uniform(kb, (N_OUT,), dtype=jnp.float32,
                              minval=-bound, maxval=bound)

    out = mtp_head(x, weight, bias)
    out = jax.block_until_ready(out)

    # Reference check against plain JAX
    ref = x @ weight.T + bias
    assert out.shape == (B, S, N_OUT), out.shape
    assert jnp.allclose(out, ref, atol=1e-4, rtol=1e-4), "mismatch vs reference"

    print("KERNEL_OK")
</pallas_src>

<mosaic_0001>
module attributes {stable_mosaic.version = 11 : i64} {
  func.func @_mtp_head_kernel(%arg0: i32, %arg1: memref<16x32xf32, #tpu.memory_space<vmem>>, %arg2: memref<32x1408xf32, #tpu.memory_space<vmem>>, %arg3: memref<1x1408xf32, #tpu.memory_space<vmem>>, %arg4: memref<16x1408xf32, #tpu.memory_space<vmem>>) attributes {dimension_semantics = [#tpu.dimension_semantics<parallel>], iteration_bounds = array<i64: 1>, scalar_prefetch = 0 : i64, scratch_operands = 0 : i64, tpu.core_type = #tpu.core_type<tc>, window_params = [{transform_indices = @transform_0, window_bounds = array<i64: 16, 32>}, {pipeline_mode = #tpu.pipeline_mode<synchronous>, transform_indices = @transform_1, window_bounds = array<i64: 32, 1408>}, {pipeline_mode = #tpu.pipeline_mode<synchronous>, transform_indices = @transform_2, window_bounds = array<i64: 1, 1408>}, {transform_indices = @transform_3, window_bounds = array<i64: 16, 1408>}]} {
    %c0 = arith.constant 0 : index
    %c0_0 = arith.constant 0 : index
    %0 = vector.load %arg1[%c0, %c0_0] : memref<16x32xf32, #tpu.memory_space<vmem>>, vector<16x32xf32>
    %c0_1 = arith.constant 0 : index
    %c0_2 = arith.constant 0 : index
    %1 = vector.load %arg2[%c0_1, %c0_2] : memref<32x1408xf32, #tpu.memory_space<vmem>>, vector<32x1408xf32>
    %cst = arith.constant dense<0.000000e+00> : vector<16x1408xf32>
    %2 = tpu.matmul %0, %1, %cst {dimension_numbers = #tpu.dot_dimension_numbers<[1], [0], [0], [1], [0, 0, 1, 1], [], []>} : vector<16x32xf32>, vector<32x1408xf32>, vector<16x1408xf32> -> vector<16x1408xf32>
    %c0_3 = arith.constant 0 : index
    %c0_4 = arith.constant 0 : index
    %3 = vector.load %arg3[%c0_3, %c0_4] : memref<1x1408xf32, #tpu.memory_space<vmem>>, vector<1x1408xf32>
    %4 = vector.broadcast %3 : vector<1x1408xf32> to vector<16x1408xf32>
    %5 = arith.addf %2, %4 : vector<16x1408xf32>
    %c0_5 = arith.constant 0 : index
    %c0_6 = arith.constant 0 : index
    %6 = vector.load %arg4[%c0_5, %c0_6] : memref<16x1408xf32, #tpu.memory_space<vmem>>, vector<16x1408xf32>
    tpu.vector_store %arg4[%c0_5, %c0_6], %5 {strides = array<i32>} : memref<16x1408xf32, #tpu.memory_space<vmem>>, vector<16x1408xf32>,
    return
  }
  func.func @transform_0(%arg0: i32) -> (i32, i32) {
    %c0_i32 = arith.constant 0 : i32
    %c0_i32_0 = arith.constant 0 : i32
    return %arg0, %c0_i32 : i32, i32
  }
  func.func @transform_1(%arg0: i32) -> (i32, i32) {
    %c0_i32 = arith.constant 0 : i32
    %c0_i32_0 = arith.constant 0 : i32
    %c0_i32_1 = arith.constant 0 : i32
    return %c0_i32, %c0_i32_0 : i32, i32
  }
  func.func @transform_2(%arg0: i32) -> (i32, i32) {
    %c0_i32 = arith.constant 0 : i32
    %c0_i32_0 = arith.constant 0 : i32
    %c0_i32_1 = arith.constant 0 : i32
    return %c0_i32, %c0_i32_0 : i32, i32
  }
  func.func @transform_3(%arg0: i32) -> (i32, i32) {
    %c0_i32 = arith.constant 0 : i32
    %c0_i32_0 = arith.constant 0 : i32
    return %arg0, %c0_i32 : i32, i32
  }
}

</mosaic_0001>

<llo_original>
// kernel: tpu_custom_call.1
$region0: #{tpu_custom_call.1}
  #allocation0 [shape = 'u32[]', space=smem, size = 0x4, offset = 0x4, fixed_abs, tag = 'smem constant byte address 0x4 - core index']
  #allocation1 [shape = 'u32[144,128]{1,0:T(1,128)}', space=vmem, size = 0x12000, scoped, tag = 'internal scratch']
  %s0 = inlined_call_operand.hbm [shape: f32[16,32], index: 0, kind: input, shape index: {}]
  %s1 = inlined_call_operand.hbm [shape: f32[32,1408], index: 1, kind: input, shape index: {}]
  %s2 = inlined_call_operand.hbm [shape: f32[1,1408], index: 2, kind: input, shape index: {}]
  %s3 = inlined_call_operand.hbm [shape: f32[16,1408], index: 3, kind: output, shape index: {}]
  %s4 = sld [smem:[#allocation0]]
  $region34: #{tpu_custom_call.1} parent=0
    _
  %s6 = ssub.s32 1, %s4
  %s7 = scalar_select 0, %s6, %s4
  $region1: #{tpu_custom_call.1} parent=0
    #allocation2 [shape = 'u8[8192]{0}', space=vmem, size = 0x2000, scoped, tag = 'input window, operand 0, single buffered']
    #allocation3 [shape = 's32[1]{0}', space=sflag, size = 0x4, scoped, tag = 'scoped memory for tpu_custom_call.1']
    #allocation4 [shape = 's32[1]{0}', space=sflag, size = 0x4, scoped, tag = 'scoped memory for tpu_custom_call.1']
    #allocation5 [shape = 'u8[180224]{0}', space=vmem, size = 0x2c000, scoped, tag = 'input window, operand 1, single buffered']
    #allocation6 [shape = 's32[1]{0}', space=sflag, size = 0x4, scoped, tag = 'scoped memory for tpu_custom_call.1']
    #allocation7 [shape = 'u8[5632]{0}', space=vmem, size = 0x1800, scoped, tag = 'input window, operand 2, single buffered']
    #allocation8 [shape = 'u8[90112]{0}', space=vmem, size = 0x16000, scoped, tag = 'output window, operand 0, single buffered']
    %8 = vsyncpa [#allocation3], 0
    %9 = vsyncpa [#allocation6], 0
    %10 = vsyncpa [#allocation4], 0
    // Predicated region
    $region2: #{tpu_custom_call.1} parent=1 // pred_check
      _
    $region3: #{tpu_custom_call.1} parent=1 // pred_check_branch
      %12 = sbr.rel (0) target = $region5
    $region4: #{tpu_custom_call.1} parent=1 // pred_region
      %s14 = ssub.s32 256, 256
      %15 = vsyncadd [#allocation3], %s14
      %s16 = sshll.u32 [#allocation2], 4
      %s17 = int_to_ptr.vmem [resolvable:$true] %s16
      %22 = dma.hbm_to_vmem [thread:$0]  %s0, 256, %s17, [#allocation3], 128, 128, 8
    $region5: #{tpu_custom_call.1} parent=1 // pred_fallthru
      _
    // Predicated region
    $region6: #{tpu_custom_call.1} parent=1 // pred_check
      _
    $region7: #{tpu_custom_call.1} parent=1 // pred_check_branch
      %24 = sbr.rel (0) target = $region9
    $region8: #{tpu_custom_call.1} parent=1 // pred_region
      %s26 = ssub.s32 5632, 5632
      %27 = vsyncadd [#allocation6], %s26
      %s28 = sshll.u32 [#allocation5], 4
      %s29 = int_to_ptr.vmem [resolvable:$true] %s28
      %34 = dma.hbm_to_vmem [thread:$0]  %s1, 5632, %s29, [#allocation6], 1408, 1408, 88
    $region9: #{tpu_custom_call.1} parent=1 // pred_fallthru
      _
    // Predicated region
    $region10: #{tpu_custom_call.1} parent=1 // pred_check
      _
    $region11: #{tpu_custom_call.1} parent=1 // pred_check_branch
      %36 = sbr.rel (0) target = $region13
    $region12: #{tpu_custom_call.1} parent=1 // pred_region
      %s38 = ssub.s32 176, 176
      %39 = vsyncadd [#allocation6], %s38
      %s41 = sshll.u32 [#allocation7], 4
      %s42 = int_to_ptr.vmem [resolvable:$true] %s41
      %44 = dma.hbm_to_vmem [thread:$0]  %s2, 176, %s42, [#allocation6]
    $region13: #{tpu_custom_call.1} parent=1 // pred_fallthru
      _
    // Predicated region
    $region14: #{tpu_custom_call.1} parent=1 // pred_check
      _
    $region15: #{tpu_custom_call.1} parent=1 // pred_check_branch
      %46 = sbr.rel (0) target = $region17
    $region16: #{tpu_custom_call.1} parent=1 // pred_region
      %47 = dma.done [#allocation3], 256
    $region17: #{tpu_custom_call.1} parent=1 // pred_fallthru
      _
    // Predicated region
    $region18: #{tpu_custom_call.1} parent=1 // pred_check
      _
    $region19: #{tpu_custom_call.1} parent=1 // pred_check_branch
      %49 = sbr.rel (0) target = $region21
    $region20: #{tpu_custom_call.1} parent=1 // pred_region
      %50 = dma.done [#allocation6], 5632
    $region21: #{tpu_custom_call.1} parent=1 // pred_fallthru
      _
    // Predicated region
    $region22: #{tpu_custom_call.1} parent=1 // pred_check
      _
    $region23: #{tpu_custom_call.1} parent=1 // pred_check_branch
      %52 = sbr.rel (0) target = $region25
    $region24: #{tpu_custom_call.1} parent=1 // pred_region
      %53 = dma.done [#allocation6], 176
    $region25: #{tpu_custom_call.1} parent=1 // pred_fallthru
      _
    %v54 = vld [vmem:[#allocation2] sm:$0xff]
    %v55 = vld [vmem:[#allocation2 + $0x8] sm:$0xff]
    %v56 = vld [vmem:[#allocation5] sm:$0xff]
    %v57 = vld [vmem:[#allocation5 + $0x8] sm:$0xff]
    %v58 = vld [vmem:[#allocation5 + $0x10] sm:$0xff]
    %v59 = vld [vmem:[#allocation5 + $0x18] sm:$0xff]
    %v60 = vld [vmem:[#allocation5 + $0x20] sm:$0xff]
    %v61 = vld [vmem:[#allocation5 + $0x28] sm:$0xff]
    %v62 = vld [vmem:[#allocation5 + $0x30] sm:$0xff]
    %v63 = vld [vmem:[#allocation5 + $0x38] sm:$0xff]
    %v64 = vld [vmem:[#allocation5 + $0x40] sm:$0xff]
    %v65 = vld [vmem:[#allocation5 + $0x48] sm:$0xff]
    %v66 = vld [vmem:[#allocation5 + $0x50] sm:$0xff]
    %v67 = vld [vmem:[#allocation5 + $0x58] sm:$0xff]
    %v68 = vld [vmem:[#allocation5 + $0x60] sm:$0xff]
    %v69 = vld [vmem:[#allocation5 + $0x68] sm:$0xff]
    %v70 = vld [vmem:[#allocation5 + $0x70] sm:$0xff]
    %v71 = vld [vmem:[#allocation5 + $0x78] sm:$0xff]
    %v72 = vld [vmem:[#allocation5 + $0x80] sm:$0xff]
    %v73 = vld [vmem:[#allocation5 + $0x88] sm:$0xff]
    %v74 = vld [vmem:[#allocation5 + $0x90] sm:$0xff]
    %v75 = vld [vmem:[#allocation5 + $0x98] sm:$0xff]
    %v76 = vld [vmem:[#allocation5 + $0xa0] sm:$0xff]
    %v77 = vld [vmem:[#allocation5 + $0xa8] sm:$0xff]
    %v78 = vld [vmem:[#allocation5 + $0xb0] sm:$0xff]
    %v79 = vld [vmem:[#allocation5 + $0xb8] sm:$0xff]
    %v80 = vld [vmem:[#allocation5 + $0xc0] sm:$0xff]
    %v81 = vld [vmem:[#allocation5 + $0xc8] sm:$0xff]
    %v82 = vld [vmem:[#allocation5 + $0xd0] sm:$0xff]
    %v83 = vld [vmem:[#allocation5 + $0xd8] sm:$0xff]
    %v84 = vld [vmem:[#allocation5 + $0xe0] sm:$0xff]
    %v85 = vld [vmem:[#allocation5 + $0xe8] sm:$0xff]
    %v86 = vld [vmem:[#allocation5 + $0xf0] sm:$0xff]
    %v87 = vld [vmem:[#allocation5 + $0xf8] sm:$0xff]
    %v88 = vld [vmem:[#allocation5 + $0x100] sm:$0xff]
    %v89 = vld [vmem:[#allocation5 + $0x108] sm:$0xff]
    %v90 = vld [vmem:[#allocation5 + $0x110] sm:$0xff]
    %v91 = vld [vmem:[#allocation5 + $0x118] sm:$0xff]
    %v92 = vld [vmem:[#allocation5 + $0x120] sm:$0xff]
    %v93 = vld [vmem:[#allocation5 + $0x128] sm:$0xff]
    %v94 = vld [vmem:[#allocation5 + $0x130] sm:$0xff]
    %v95 = vld [vmem:[#allocation5 + $0x138] sm:$0xff]
    %v96 = vld [vmem:[#allocation5 + $0x140] sm:$0xff]
    %v97 = vld [vmem:[#allocation5 + $0x148] sm:$0xff]
    %v98 = vld [vmem:[#allocation5 + $0x150] sm:$0xff]
    %v99 = vld [vmem:[#allocation5 + $0x158] sm:$0xff]
    %v100 = vld [vmem:[#allocation7] sm:$0xff]
    %v101 = vld [vmem:[#allocation7 + $0x8] sm:$0x7]
    %v104 = vlaneseq
    %v105 = vshrl.u32 %v104, 7
    %v106 = vsub.s32 0, %v105
    %v107 = vrot.slane %v100, %v106
    %v108 = vlaneseq
    %v109 = vshrl.u32 %v108, 7
    %v110 = vsub.s32 1, %v109
    %v111 = vrot.slane %v100, %v110
    %v112 = vlaneseq
    %v113 = vshrl.u32 %v112, 7
    %v114 = vsub.s32 2, %v113
    %v115 = vrot.slane %v100, %v114
    %v116 = vlaneseq
    %v117 = vshrl.u32 %v116, 7
    %v118 = vsub.s32 3, %v117
    %v119 = vrot.slane %v100, %v118
    %v120 = vlaneseq
    %v121 = vshrl.u32 %v120, 7
    %v122 = vsub.s32 4, %v121
    %v123 = vrot.slane %v100, %v122
    %v124 = vlaneseq
    %v125 = vshrl.u32 %v124, 7
    %v126 = vsub.s32 5, %v125
    %v127 = vrot.slane %v100, %v126
    %v128 = vlaneseq
    %v129 = vshrl.u32 %v128, 7
    %v130 = vsub.s32 6, %v129
    %v131 = vrot.slane %v100, %v130
    %v132 = vlaneseq
    %v133 = vshrl.u32 %v132, 7
    %v134 = vsub.s32 7, %v133
    %v135 = vrot.slane %v100, %v134
    %v136 = vlaneseq
    %v137 = vshrl.u32 %v136, 7
    %v138 = vsub.s32 0, %v137
    %v139 = vrot.slane %v101, %v138
    %v140 = vlaneseq
    %v141 = vshrl.u32 %v140, 7
    %v142 = vsub.s32 1, %v141
    %v143 = vrot.slane %v101, %v142
    %v144 = vlaneseq
    %v145 = vshrl.u32 %v144, 7
    %v146 = vsub.s32 2, %v145
    %v147 = vrot.slane %v101, %v146
    %vm159 = vcmask 261120
    %v161 = vsel %vm159, %v54, 0
    %v164 = vsel %vm159, %v55, 0
    %166 = vmatprep.subr.mxu0 %v57
    %167 = vmatpush1.msra.mxu0 %v56
    %168 = vmatprep.subr.mxu0 %v68
    %169 = vmatpush1.msra.mxu0 %v67
    %170 = vmatprep.subr.mxu0 %v79
    %171 = vmatpush1.msra.mxu0 %v78
    %172 = vmatprep.subr.mxu0 %v90
    %173 = vmatpush1.msra.mxu0 %v89
    %174 = vmatprep.subr.mxu0 0.0
    %175 = vmatpush1.msra.mxu0 0.0
    %176 = vmatprep.subr.mxu0 0.0
    %177 = vmatpush1.msra.mxu0 0.0
    %178 = vmatprep.subr.mxu0 0.0
    %179 = vmatpush1.msra.mxu0 0.0
    %180 = vmatprep.subr.mxu0 0.0
    %181 = vmatpush1.msra.mxu0 0.0
    %182 = vmatprep.subr.mxu0 0.0
    %183 = vmatpush1.msra.mxu0 0.0
    %184 = vmatprep.subr.mxu0 0.0
    %185 = vmatpush1.msra.mxu0 0.0
    %186 = vmatprep.subr.mxu0 0.0
    %187 = vmatpush1.msra.mxu0 0.0
    %188 = vmatprep.subr.mxu0 0.0
    %189 = vmatpush1.msra.mxu0 0.0
    %190 = vmatprep.subr.mxu0 0.0
    %191 = vmatpush1.msra.mxu0 0.0
    %192 = vmatprep.subr.mxu0 0.0
    %193 = vmatpush1.msra.mxu0 0.0
    %194 = vmatprep.subr.mxu0 0.0
    %195 = vmatpush1.msra.mxu0 0.0
    %196 = vmatprep.subr.mxu0 0.0
    %197 = vmatpush1.msra.mxu0 0.0
    %198 = vmatprep.subr.mxu0 0.0
    %199 = vmatpush1.msra.mxu0 0.0
    %200 = vmatprep.subr.mxu0 0.0
    %201 = vmatpush1.msra.mxu0 0.0
    %202 = vmatprep.subr.mxu0 0.0
    %203 = vmatpush1.msra.mxu0 0.0
    %204 = vmatprep.subr.mxu0 0.0
    %205 = vmatpush1.msra.mxu0 0.0
    %206 = vmatprep.subr.mxu0 0.0
    %207 = vmatpush1.msra.mxu0 0.0
    %208 = vmatprep.subr.mxu0 0.0
    %209 = vmatpush1.msra.mxu0 0.0
    %210 = vmatprep.subr.mxu0 0.0
    %211 = vmatpush1.msra.mxu0 0.0
    %212 = vmatprep.subr.mxu0 0.0
    %213 = vmatpush1.msra.mxu0 0.0
    %214 = vmatprep.subr.mxu0 0.0
    %215 = vmatpush1.msra.mxu0 0.0
    %216 = vmatprep.subr.mxu0 0.0
    %217 = vmatpush1.msra.mxu0 0.0
    %218 = vmatprep.subr.mxu0 0.0
    %219 = vmatpush1.msra.mxu0 0.0
    %220 = vmatprep.subr.mxu0 0.0
    %221 = vmatpush1.msra.mxu0 0.0
    %222 = vmatprep.subr.mxu0 0.0
    %223 = vmatpush1.msra.mxu0 0.0
    %224 = vmatprep.subr.mxu0 0.0
    %225 = vmatpush1.msra.mxu0 0.0
    %226 = vmatprep.subr.mxu0 0.0
    %227 = vmatpush1.msra.mxu0 0.0
    %228 = vmatprep.subr.mxu0 0.0
    %229 = vmatpush1.msra.mxu0 0.0
    %230 = vmatprep.mubr.f32.mxu0 0.0
    %231 = vmatmul.mubr.f32.gmra.mrb[0].mxu0 %v161
    %v232 = vpop.f32.mrb[0].mxu0
    %v233 = vadd.f32 %v107, %v232
    %v234 = vpop.f32.mrb[0].mxu0
    %v235 = vadd.f32 %v111, %v234
    %236 = vmatprep.mubr.f32.mxu0 0.0
    %237 = vmatmul.mubr.f32.gmra.mrb[0].mxu0 %v164
    %v238 = vpop.f32.mrb[0].mxu0
    %v239 = vadd.f32 %v107, %v238
    %v240 = vpop.f32.mrb[0].mxu0
    %v241 = vadd.f32 %v111, %v240
    %242 = vdwg.mxu0
    %243 = vmatprep.subr.mxu0 %v59
    %244 = vmatpush1.msra.mxu0 %v58
    %245 = vmatprep.subr.mxu0 %v70
    %246 = vmatpush1.msra.mxu0 %v69
    %247 = vmatprep.subr.mxu0 %v81
    %248 = vmatpush1.msra.mxu0 %v80
    %249 = vmatprep.subr.mxu0 %v92
    %250 = vmatpush1.msra.mxu0 %v91
    %251 = vmatprep.subr.mxu0 0.0
    %252 = vmatpush1.msra.mxu0 0.0
    %253 = vmatprep.subr.mxu0 0.0
    %254 = vmatpush1.msra.mxu0 0.0
    %255 = vmatprep.subr.mxu0 0.0
    %256 = vmatpush1.msra.mxu0 0.0
    %257 = vmatprep.subr.mxu0 0.0
    %258 = vmatpush1.msra.mxu0 0.0
    %259 = vmatprep.subr.mxu0 0.0
    %260 = vmatpush1.msra.mxu0 0.0
    %261 = vmatprep.subr.mxu0 0.0
    %262 = vmatpush1.msra.mxu0 0.0
    %263 = vmatprep.subr.mxu0 0.0
    %264 = vmatpush1.msra.mxu0 0.0
    %265 = vmatprep.subr.mxu0 0.0
    %266 = vmatpush1.msra.mxu0 0.0
    %267 = vmatprep.subr.mxu0 0.0
    %268 = vmatpush1.msra.mxu0 0.0
    %269 = vmatprep.subr.mxu0 0.0
    %270 = vmatpush1.msra.mxu0 0.0
    %271 = vmatprep.subr.mxu0 0.0
    %272 = vmatpush1.msra.mxu0 0.0
    %273 = vmatprep.subr.mxu0 0.0
    %274 = vmatpush1.msra.mxu0 0.0
    %275 = vmatprep.subr.mxu0 0.0
    %276 = vmatpush1.msra.mxu0 0.0
    %277 = vmatprep.subr.mxu0 0.0
    %278 = vmatpush1.msra.mxu0 0.0
    %279 = vmatprep.subr.mxu0 0.0
    %280 = vmatpush1.msra.mxu0 0.0
    %281 = vmatprep.subr.mxu0 0.0
    %282 = vmatpush1.msra.mxu0 0.0
    %283 = vmatprep.subr.mxu0 0.0
    %284 = vmatpush1.msra.mxu0 0.0
    %285 = vmatprep.subr.mxu0 0.0
    %286 = vmatpush1.msra.mxu0 0.0
    %287 = vmatprep.subr.mxu0 0.0
    %288 = vmatpush1.msra.mxu0 0.0
    %289 = vmatprep.subr.mxu0 0.0
    %290 = vmatpush1.msra.mxu0 0.0
    %291 = vmatprep.subr.mxu0 0.0
    %292 = vmatpush1.msra.mxu0 0.0
    %293 = vmatprep.subr.mxu0 0.0
    %294 = vmatpush1.msra.mxu0 0.0
    %295 = vmatprep.subr.mxu0 0.0
    %296 = vmatpush1.msra.mxu0 0.0
    %297 = vmatprep.subr.mxu0 0.0
    %298 = vmatpush1.msra.mxu0 0.0
    %299 = vmatprep.subr.mxu0 0.0
    %300 = vmatpush1.msra.mxu0 0.0
    %301 = vmatprep.subr.mxu0 0.0
    %302 = vmatpush1.msra.mxu0 0.0
    %303 = vmatprep.subr.mxu0 0.0
    %304 = vmatpush1.msra.mxu0 0.0
    %305 = vmatprep.subr.mxu0 0.0
    %306 = vmatpush1.msra.mxu0 0.0
    %307 = vmatprep.mubr.f32.mxu0 0.0
    %308 = vmatmul.mubr.f32.gmra.mrb[0].mxu0 %v161
    %v309 = vpop.f32.mrb[0].mxu0
    %v310 = vadd.f32 %v115, %v309
    %v311 = vpop.f32.mrb[0].mxu0
    %v312 = vadd.f32 %v119, %v311
    %313 = vmatprep.mubr.f32.mxu0 0.0
    %314 = vmatmul.mubr.f32.gmra.mrb[0].mxu0 %v164
    %v315 = vpop.f32.mrb[0].mxu0
    %v316 = vadd.f32 %v115, %v315
    %v317 = vpop.f32.mrb[0].mxu0
    %v318 = vadd.f32 %v119, %v317
    %319 = vdwg.mxu0
    %320 = vmatprep.subr.mxu0 %v61
    %321 = vmatpush1.msra.mxu0 %v60
    %322 = vmatprep.subr.mxu0 %v72
    %323 = vmatpush1.msra.mxu0 %v71
    %324 = vmatprep.subr.mxu0 %v83
    %325 = vmatpush1.msra.mxu0 %v82
    %326 = vmatprep.subr.mxu0 %v94
    %327 = vmatpush1.msra.mxu0 %v93
    %328 = vmatprep.subr.mxu0 0.0
    %329 = vmatpush1.msra.mxu0 0.0
    %330 = vmatprep.subr.mxu0 0.0
    %331 = vmatpush1.msra.mxu0 0.0
    %332 = vmatprep.subr.mxu0 0.0
    %333 = vmatpush1.msra.mxu0 0.0
    %334 = vmatprep.subr.mxu0 0.0
    %335 = vmatpush1.msra.mxu0 0.0
    %336 = vmatprep.subr.mxu0 0.0
    %337 = vmatpush1.msra.mxu0 0.0
    %338 = vmatprep.subr.mxu0 0.0
    %339 = vmatpush1.msra.mxu0 0.0
    %340 = vmatprep.subr.mxu0 0.0
    %341 = vmatpush1.msra.mxu0 0.0
    %342 = vmatprep.subr.mxu0 0.0
    %343 = vmatpush1.msra.mxu0 0.0
    %344 = vmatprep.subr.mxu0 0.0
    %345 = vmatpush1.msra.mxu0 0.0
    %346 = vmatprep.subr.mxu0 0.0
    %347 = vmatpush1.msra.mxu0 0.0
    %348 = vmatprep.subr.mxu0 0.0
    %349 = vmatpush1.msra.mxu0 0.0
    %350 = vmatprep.subr.mxu0 0.0
    %351 = vmatpush1.msra.mxu0 0.0
    %352 = vmatprep.subr.mxu0 0.0
    %353 = vmatpush1.msra.mxu0 0.0
    %354 = vmatprep.subr.mxu0 0.0
    %355 = vmatpush1.msra.mxu0 0.0
    %356 = vmatprep.subr.mxu0 0.0
    %357 = vmatpush1.msra.mxu0 0.0
    %358 = vmatprep.subr.mxu0 0.0
    %359 = vmatpush1.msra.mxu0 0.0
    %360 = vmatprep.subr.mxu0 0.0
    %361 = vmatpush1.msra.mxu0 0.0
    %362 = vmatprep.subr.mxu0 0.0
    %363 = vmatpush1.msra.mxu0 0.0
    %364 = vmatprep.subr.mxu0 0.0
    %365 = vmatpush1.msra.mxu0 0.0
    %366 = vmatprep.subr.mxu0 0.0
    %367 = vmatpush1.msra.mxu0 0.0
    %368 = vmatprep.subr.mxu0 0.0
    %369 = vmatpush1.msra.mxu0 0.0
    %370 = vmatprep.subr.mxu0 0.0
    %371 = vmatpush1.msra.mxu0 0.0
    %372 = vmatprep.subr.mxu0 0.0
    %373 = vmatpush1.msra.mxu0 0.0
    %374 = vmatprep.subr.mxu0 0.0
    %375 = vmatpush1.msra.mxu0 0.0
    %376 = vmatprep.subr.mxu0 0.0
    %377 = vmatpush1.msra.mxu0 0.0
    %378 = vmatprep.subr.mxu0 0.0
    %379 = vmatpush1.msra.mxu0 0.0
    %380 = vmatprep.subr.mxu0 0.0
    %381 = vmatpush1.msra.mxu0 0.0
    %382 = vmatprep.subr.mxu0 0.0
    %383 = vmatpush1.msra.mxu0 0.0
    %384 = vmatprep.mubr.f32.mxu0 0.0
    %385 = vmatmul.mubr.f32.gmra.mrb[0].mxu0 %v161
    %v386 = vpop.f32.mrb[0].mxu0
    %v387 = vadd.f32 %v123, %v386
    %v388 = vpop.f32.mrb[0].mxu0
    %v389 = vadd.f32 %v127, %v388
    %390 = vmatprep.mubr.f32.mxu0 0.0
    %391 = vmatmul.mubr.f32.gmra.mrb[0].mxu0 %v164
    %v392 = vpop.f32.mrb[0].mxu0
    %v393 = vadd.f32 %v123, %v392
    %v394 = vpop.f32.mrb[0].mxu0
    %v395 = vadd.f32 %v127, %v394
    %396 = vdwg.mxu0
    %397 = vmatprep.subr.mxu0 %v63
    %398 = vmatpush1.msra.mxu0 %v62
    %399 = vmatprep.subr.mxu0 %v74
    %400 = vmatpush1.msra.mxu0 %v73
    %401 = vmatprep.subr.mxu0 %v85
    %402 = vmatpush1.msra.mxu0 %v84
    %403 = vmatprep.subr.mxu0 %v96
    %404 = vmatpush1.msra.mxu0 %v95
    %405 = vmatprep.subr.mxu0 0.0
    %406 = vmatpush1.msra.mxu0 0.0
    %407 = vmatprep.subr.mxu0 0.0
    %408 = vmatpush1.msra.mxu0 0.0
    %409 = vmatprep.subr.mxu0 0.0
    %410 = vmatpush1.msra.mxu0 0.0
    %411 = vmatprep.subr.mxu0 0.0
    %412 = vmatpush1.msra.mxu0 0.0
    %413 = vmatprep.subr.mxu0 0.0
    %414 = vmatpush1.msra.mxu0 0.0
    %415 = vmatprep.subr.mxu0 0.0
    %416 = vmatpush1.msra.mxu0 0.0
    %417 = vmatprep.subr.mxu0 0.0
    %418 = vmatpush1.msra.mxu0 0.0
    %419 = vmatprep.subr.mxu0 0.0
    %420 = vmatpush1.msra.mxu0 0.0
    %421 = vmatprep.subr.mxu0 0.0
    %422 = vmatpush1.msra.mxu0 0.0
    %423 = vmatprep.subr.mxu0 0.0
    %424 = vmatpush1.msra.mxu0 0.0
    %425 = vmatprep.subr.mxu0 0.0
    %426 = vmatpush1.msra.mxu0 0.0
    %427 = vmatprep.subr.mxu0 0.0
    %428 = vmatpush1.msra.mxu0 0.0
    %429 = vmatprep.subr.mxu0 0.0
    %430 = vmatpush1.msra.mxu0 0.0
    %431 = vmatprep.subr.mxu0 0.0
    %432 = vmatpush1.msra.mxu0 0.0
    %433 = vmatprep.subr.mxu0 0.0
    %434 = vmatpush1.msra.mxu0 0.0
    %435 = vmatprep.subr.mxu0 0.0
    %436 = vmatpush1.msra.mxu0 0.0
    %437 = vmatprep.subr.mxu0 0.0
    %438 = vmatpush1.msra.mxu0 0.0
    %439 = vmatprep.subr.mxu0 0.0
    %440 = vmatpush1.msra.mxu0 0.0
    %441 = vmatprep.subr.mxu0 0.0
    %442 = vmatpush1.msra.mxu0 0.0
    %443 = vmatprep.subr.mxu0 0.0
    %444 = vmatpush1.msra.mxu0 0.0
    %445 = vmatprep.subr.mxu0 0.0
    %446 = vmatpush1.msra.mxu0 0.0
    %447 = vmatprep.subr.mxu0 0.0
    %448 = vmatpush1.msra.mxu0 0.0
    %449 = vmatprep.subr.mxu0 0.0
    %450 = vmatpush1.msra.mxu0 0.0
    %451 = vmatprep.subr.mxu0 0.0
    %452 = vmatpush1.msra.mxu0 0.0
    %453 = vmatprep.subr.mxu0 0.0
    %454 = vmatpush1.msra.mxu0 0.0
    %455 = vmatprep.subr.mxu0 0.0
    %456 = vmatpush1.msra.mxu0 0.0
    %457 = vmatprep.subr.mxu0 0.0
    %458 = vmatpush1.msra.mxu0 0.0
    %459 = vmatprep.subr.mxu0 0.0
    %460 = vmatpush1.msra.mxu0 0.0
    %461 = vmatprep.mubr.f32.mxu0 0.0
    %462 = vmatmul.mubr.f32.gmra.mrb[0].mxu0 %v161
    %v463 = vpop.f32.mrb[0].mxu0
    %v464 = vadd.f32 %v131, %v463
    %v465 = vpop.f32.mrb[0].mxu0
    %v466 = vadd.f32 %v135, %v465
    %467 = vmatprep.mubr.f32.mxu0 0.0
    %468 = vmatmul.mubr.f32.gmra.mrb[0].mxu0 %v164
    %v469 = vpop.f32.mrb[0].mxu0
    %v470 = vadd.f32 %v131, %v469
    %v471 = vpop.f32.mrb[0].mxu0
    %v472 = vadd.f32 %v135, %v471
    %473 = vdwg.mxu0
    %474 = vmatprep.subr.mxu0 %v65
    %475 = vmatpush1.msra.mxu0 %v64
    %476 = vmatprep.subr.mxu0 %v76
    %477 = vmatpush1.msra.mxu0 %v75
    %478 = vmatprep.subr.mxu0 %v87
    %479 = vmatpush1.msra.mxu0 %v86
    %480 = vmatprep.subr.mxu0 %v98
    %481 = vmatpush1.msra.mxu0 %v97
    %482 = vmatprep.subr.mxu0 0.0
    %483 = vmatpush1.msra.mxu0 0.0
    %484 = vmatprep.subr.mxu0 0.0
    %485 = vmatpush1.msra.mxu0 0.0
    %486 = vmatprep.subr.mxu0 0.0
    %487 = vmatpush1.msra.mxu0 0.0
    %488 = vmatprep.subr.mxu0 0.0
    %489 = vmatpush1.msra.mxu0 0.0
    %490 = vmatprep.subr.mxu0 0.0
    %491 = vmatpush1.msra.mxu0 0.0
    %492 = vmatprep.subr.mxu0 0.0
    %493 = vmatpush1.msra.mxu0 0.0
    %494 = vmatprep.subr.mxu0 0.0
    %495 = vmatpush1.msra.mxu0 0.0
    %496 = vmatprep.subr.mxu0 0.0
    %497 = vmatpush1.msra.mxu0 0.0
    %498 = vmatprep.subr.mxu0 0.0
    %499 = vmatpush1.msra.mxu0 0.0
    %500 = vmatprep.subr.mxu0 0.0
    %501 = vmatpush1.msra.mxu0 0.0
    %502 = vmatprep.subr.mxu0 0.0
    %503 = vmatpush1.msra.mxu0 0.0
    %504 = vmatprep.subr.mxu0 0.0
    %505 = vmatpush1.msra.mxu0 0.0
    %506 = vmatprep.subr.mxu0 0.0
    %507 = vmatpush1.msra.mxu0 0.0
    %508 = vmatprep.subr.mxu0 0.0
    %509 = vmatpush1.msra.mxu0 0.0
    %510 = vmatprep.subr.mxu0 0.0
    %511 = vmatpush1.msra.mxu0 0.0
    %512 = vmatprep.subr.mxu0 0.0
    %513 = vmatpush1.msra.mxu0 0.0
    %514 = vmatprep.subr.mxu0 0.0
    %515 = vmatpush1.msra.mxu0 0.0
    %516 = vmatprep.subr.mxu0 0.0
    %517 = vmatpush1.msra.mxu0 0.0
    %518 = vmatprep.subr.mxu0 0.0
    %519 = vmatpush1.msra.mxu0 0.0
    %520 = vmatprep.subr.mxu0 0.0
    %521 = vmatpush1.msra.mxu0 0.0
    %522 = vmatprep.subr.mxu0 0.0
    %523 = vmatpush1.msra.mxu0 0.0
    %524 = vmatprep.subr.mxu0 0.0
    %525 = vmatpush1.msra.mxu0 0.0
    %526 = vmatprep.subr.mxu0 0.0
    %527 = vmatpush1.msra.mxu0 0.0
    %528 = vmatprep.subr.mxu0 0.0
    %529 = vmatpush1.msra.mxu0 0.0
    %530 = vmatprep.subr.mxu0 0.0
    %531 = vmatpush1.msra.mxu0 0.0
    %532 = vmatprep.subr.mxu0 0.0
    %533 = vmatpush1.msra.mxu0 0.0
    %534 = vmatprep.subr.mxu0 0.0
    %535 = vmatpush1.msra.mxu0 0.0
    %536 = vmatprep.subr.mxu0 0.0
    %537 = vmatpush1.msra.mxu0 0.0
    %538 = vmatprep.mubr.f32.mxu0 0.0
    %539 = vmatmul.mubr.f32.gmra.mrb[0].mxu0 %v161
    %v540 = vpop.f32.mrb[0].mxu0
    %v541 = vadd.f32 %v139, %v540
    %v542 = vpop.f32.mrb[0].mxu0
    %v543 = vadd.f32 %v143, %v542
    %544 = vmatprep.mubr.f32.mxu0 0.0
    %545 = vmatmul.mubr.f32.gmra.mrb[0].mxu0 %v164
    %v546 = vpop.f32.mrb[0].mxu0
    %v547 = vadd.f32 %v139, %v546
    %v548 = vpop.f32.mrb[0].mxu0
    %v549 = vadd.f32 %v143, %v548
    %550 = vdwg.mxu0
    %551 = vmatprep.subr.mxu0 0.0
    %552 = vmatpush1.msra.mxu0 %v66
    %553 = vmatprep.subr.mxu0 0.0
    %554 = vmatpush1.msra.mxu0 %v77
    %555 = vmatprep.subr.mxu0 0.0
    %556 = vmatpush1.msra.mxu0 %v88
    %557 = vmatprep.subr.mxu0 0.0
    %558 = vmatpush1.msra.mxu0 %v99
    %559 = vmatprep.subr.mxu0 0.0
    %560 = vmatpush1.msra.mxu0 0.0
    %561 = vmatprep.subr.mxu0 0.0
    %562 = vmatpush1.msra.mxu0 0.0
    %563 = vmatprep.subr.mxu0 0.0
    %564 = vmatpush1.msra.mxu0 0.0
    %565 = vmatprep.subr.mxu0 0.0
    %566 = vmatpush1.msra.mxu0 0.0
    %567 = vmatprep.subr.mxu0 0.0
    %568 = vmatpush1.msra.mxu0 0.0
    %569 = vmatprep.subr.mxu0 0.0
    %570 = vmatpush1.msra.mxu0 0.0
    %571 = vmatprep.subr.mxu0 0.0
    %572 = vmatpush1.msra.mxu0 0.0
    %573 = vmatprep.subr.mxu0 0.0
    %574 = vmatpush1.msra.mxu0 0.0
    %575 = vmatprep.subr.mxu0 0.0
    %576 = vmatpush1.msra.mxu0 0.0
    %577 = vmatprep.subr.mxu0 0.0
    %578 = vmatpush1.msra.mxu0 0.0
    %579 = vmatprep.subr.mxu0 0.0
    %580 = vmatpush1.msra.mxu0 0.0
    %581 = vmatprep.subr.mxu0 0.0
    %582 = vmatpush1.msra.mxu0 0.0
    %583 = vmatprep.subr.mxu0 0.0
    %584 = vmatpush1.msra.mxu0 0.0
    %585 = vmatprep.subr.mxu0 0.0
    %586 = vmatpush1.msra.mxu0 0.0
    %587 = vmatprep.subr.mxu0 0.0
    %588 = vmatpush1.msra.mxu0 0.0
    %589 = vmatprep.subr.mxu0 0.0
    %590 = vmatpush1.msra.mxu0 0.0
    %591 = vmatprep.subr.mxu0 0.0
    %592 = vmatpush1.msra.mxu0 0.0
    %593 = vmatprep.subr.mxu0 0.0
    %594 = vmatpush1.msra.mxu0 0.0
    %595 = vmatprep.subr.mxu0 0.0
    %596 = vmatpush1.msra.mxu0 0.0
    %597 = vmatprep.subr.mxu0 0.0
    %598 = vmatpush1.msra.mxu0 0.0
    %599 = vmatprep.subr.mxu0 0.0
    %600 = vmatpush1.msra.mxu0 0.0
    %601 = vmatprep.subr.mxu0 0.0
    %602 = vmatpush1.msra.mxu0 0.0
    %603 = vmatprep.subr.mxu0 0.0
    %604 = vmatpush1.msra.mxu0 0.0
    %605 = vmatprep.subr.mxu0 0.0
    %606 = vmatpush1.msra.mxu0 0.0
    %607 = vmatprep.subr.mxu0 0.0
    %608 = vmatpush1.msra.mxu0 0.0
    %609 = vmatprep.subr.mxu0 0.0
    %610 = vmatpush1.msra.mxu0 0.0
    %611 = vmatprep.subr.mxu0 0.0
    %612 = vmatpush1.msra.mxu0 0.0
    %613 = vmatprep.subr.mxu0 0.0
    %614 = vmatpush1.msra.mxu0 0.0
    %615 = vmatprep.mubr.f32.mxu0 0.0
    %616 = vmatmul.mubr.f32.gmra.mrb[0].mxu0 %v161
    %v617 = vpop.f32.mrb[0].mxu0
    %v618 = vadd.f32 %v147, %v617
    %v619 = vpop.f32.mrb[0].mxu0
    %620 = vmatprep.mubr.f32.mxu0 0.0
    %621 = vmatmul.mubr.f32.gmra.mrb[0].mxu0 %v164
    %v622 = vpop.f32.mrb[0].mxu0
    %v623 = vadd.f32 %v147, %v622
    %v624 = vpop.f32.mrb[0].mxu0
    %625 = vdwg.mxu0
    %626 = vst [vmem:[#allocation8] sm:$0xff] %v233
    %627 = vst [vmem:[#allocation8 + $0x8] sm:$0xff] %v235
    %628 = vst [vmem:[#allocation8 + $0x10] sm:$0xff] %v310
    %629 = vst [vmem:[#allocation8 + $0x18] sm:$0xff] %v312
    %630 = vst [vmem:[#allocation8 + $0x20] sm:$0xff] %v387
    %631 = vst [vmem:[#allocation8 + $0x28] sm:$0xff] %v389
    %632 = vst [vmem:[#allocation8 + $0x30] sm:$0xff] %v464
    %633 = vst [vmem:[#allocation8 + $0x38] sm:$0xff] %v466
    %634 = vst [vmem:[#allocation8 + $0x40] sm:$0xff] %v541
    %635 = vst [vmem:[#allocation8 + $0x48] sm:$0xff] %v543
    %636 = vst [vmem:[#allocation8 + $0x50] sm:$0xff] %v618
    %637 = vst [vmem:[#allocation8 + $0x58] sm:$0xff] %v239
    %638 = vst [vmem:[#allocation8 + $0x60] sm:$0xff] %v241
    %639 = vst [vmem:[#allocation8 + $0x68] sm:$0xff] %v316
    %640 = vst [vmem:[#allocation8 + $0x70] sm:$0xff] %v318
    %641 = vst [vmem:[#allocation8 + $0x78] sm:$0xff] %v393
    %642 = vst [vmem:[#allocation8 + $0x80] sm:$0xff] %v395
    %643 = vst [vmem:[#allocation8 + $0x88] sm:$0xff] %v470
    %644 = vst [vmem:[#allocation8 + $0x90] sm:$0xff] %v472
    %645 = vst [vmem:[#allocation8 + $0x98] sm:$0xff] %v547
    %646 = vst [vmem:[#allocation8 + $0xa0] sm:$0xff] %v549
    %647 = vst [vmem:[#allocation8 + $0xa8] sm:$0xff] %v623
    // Predicated region
    $region26: #{tpu_custom_call.1} parent=1 // pred_check
      _
    $region27: #{tpu_custom_call.1} parent=1 // pred_check_branch
      %649 = sbr.rel (0) target = $region29
    $region28: #{tpu_custom_call.1} parent=1 // pred_region
      %s651 = ssub.s32 2816, 2816
      %652 = vsyncadd [#allocation4], %s651
      %s653 = sshll.u32 [#allocation8], 4
      %s654 = int_to_ptr.vmem [resolvable:$true] %s653
      %659 = dma.vmem_to_hbm [thread:$0]  %s654, 2816, %s3, [#allocation4], 1408, 1408, 88
    $region29: #{tpu_custom_call.1} parent=1 // pred_fallthru
      _
    // Predicated region
    $region30: #{tpu_custom_call.1} parent=1 // pred_check
      _
    $region31: #{tpu_custom_call.1} parent=1 // pred_check_branch
      %661 = sbr.rel (0) target = $region33
    $region32: #{tpu_custom_call.1} parent=1 // pred_region
      %662 = dma.done [#allocation4], 2816
    $region33: #{tpu_custom_call.1} parent=1 // pred_fallthru
      _
    %663 = vsyncpa [#allocation3], 1
    %664 = vsyncpa [#allocation6], 1
    %665 = vsyncpa [#allocation4], 1

</llo_original>
